<compile_context>
chip_gen: v7x
topology: tpu7x:2x2x1
jax: 0.10.0
libtpu: 0.0.40
codegen_flags: <defaults>
</compile_context>

<pallas_src>
import math
import functools

import jax
import jax.numpy as jnp
from jax import lax
from jax.experimental import pallas as pl
from jax.experimental.pallas import tpu as pltpu


# Safe on v7x (64 MiB physical VMEM) and above the 16/32 MiB scoped defaults on v5e/v6e.
VMEM_LIMIT = 48 * 1024 * 1024


# ---------------------------------------------------------------------------
# Tiling helper
# ---------------------------------------------------------------------------

def _pick_tile(dim, target, align):
    """Largest multiple of `align` that divides `dim` and is <= target; else full dim.

    Falling back to the full dim is always legal for a BlockSpec (block == array dim).
    """
    if dim <= target:
        return dim
    t = (target // align) * align
    while t >= align:
        if dim % t == 0:
            return t
        t -= align
    return dim


# ---------------------------------------------------------------------------
# Kernels
# ---------------------------------------------------------------------------

def _linear_kernel(x_ref, w_ref, b_ref, o_ref, acc_ref):
    # x: [tm, tk] bf16, w: [tk, tn] bf16, b: [1, tn] f32 -> o: [tm, tn]; K is grid axis 2.
    k = pl.program_id(2)

    @pl.when(k == 0)
    def _():
        acc_ref[...] = jnp.zeros_like(acc_ref)

    acc_ref[...] += jnp.dot(x_ref[...], w_ref[...],
                            preferred_element_type=jnp.float32)   # bf16 MXU, f32 acc

    @pl.when(k == pl.num_programs(2) - 1)
    def _():
        o_ref[...] = (acc_ref[...] + b_ref[...]).astype(o_ref.dtype)


def _mha_flash_kernel(q_ref, k_ref, v_ref, o_ref, m_ref, l_ref, acc_ref, *,
                      num_heads, head_dim):
    # q_ref: [1, tq, D] bf16 (1/sqrt(hd) already folded into the Q projection)
    # k_ref/v_ref: [1, tk, D] bf16
    # o_ref: [1, tq, D]  (lane-dense, heads already merged head-major)
    # scratch: m,l [H, tq, 1]; acc [H, tq, hd]  (f32 online-softmax state across kv axis)
    ki = pl.program_id(2)

    @pl.when(ki == 0)
    def _():
        m_ref[...] = jnp.full(m_ref.shape, -jnp.inf, jnp.float32)
        l_ref[...] = jnp.zeros(l_ref.shape, jnp.float32)
        acc_ref[...] = jnp.zeros(acc_ref.shape, jnp.float32)

    q_tile = q_ref[0]   # [tq, D]
    k_tile = k_ref[0]   # [tk, D]
    v_tile = v_ref[0]   # [tk, D]

    # TODO(synk): per-head hd-wide slices are lane-unaligned when head_dim < 128; for
    # large num_heads (>= 8-16) move heads to a grid axis with a [B, H, S, hd] layout.
    for h in range(num_heads):
        sl = slice(h * head_dim, (h + 1) * head_dim)
        q = q_tile[:, sl]
        k = k_tile[:, sl]
        v = v_tile[:, sl]

        # QK^T contracting the last dims directly (no transpose); bf16 MXU, f32 result.
        s = lax.dot_general(q, k, (((1,), (1,)), ((), ())),
                            preferred_element_type=jnp.float32)       # [tq, tk]

        m_prev = m_ref[h]                                             # [tq, 1]
        m_new = jnp.maximum(m_prev, jnp.max(s, axis=-1, keepdims=True))
        alpha = jnp.exp(m_prev - m_new)
        p = jnp.exp(s - m_new)                                        # f32 softmax math
        l_ref[h] = alpha * l_ref[h] + jnp.sum(p, axis=-1, keepdims=True)
        acc_ref[h] = alpha * acc_ref[h] + jnp.dot(
            p.astype(v.dtype), v, preferred_element_type=jnp.float32)  # bf16 MXU
        m_ref[h] = m_new

    @pl.when(ki == pl.num_programs(2) - 1)
    def _():
        # Exact divide (epilogue-only, essentially free) + ONE lane-dense full-width store.
        heads = [acc_ref[h] / l_ref[h] for h in range(num_heads)]
        o_ref[0] = jnp.concatenate(heads, axis=-1).astype(o_ref.dtype)


# ---------------------------------------------------------------------------
# Pallas wrappers
# ---------------------------------------------------------------------------

def pallas_linear(x, w, b, *, out_dtype=jnp.float32,
                  tm_target=256, tn_target=512, tk_target=512):
    """x: [M, K] bf16, w: [K, N] bf16, b: [N] f32 -> [M, N] out_dtype (tiled matmul)."""
    M, K = x.shape
    N = w.shape[1]
    tm = _pick_tile(M, tm_target, 8)
    tn = _pick_tile(N, tn_target, 128)
    tk = _pick_tile(K, tk_target, 128)
    grid = (M // tm, N // tn, K // tk)

    x_bytes = jnp.dtype(x.dtype).itemsize
    w_bytes = jnp.dtype(w.dtype).itemsize
    o_bytes = jnp.dtype(out_dtype).itemsize

    return pl.pallas_call(
        _linear_kernel,
        out_shape=jax.ShapeDtypeStruct((M, N), out_dtype),
        grid=grid,
        in_specs=[
            pl.BlockSpec((tm, tk), lambda i, j, k: (i, k)),
            pl.BlockSpec((tk, tn), lambda i, j, k: (k, j)),
            pl.BlockSpec((1, tn), lambda i, j, k: (0, j)),
        ],
        out_specs=pl.BlockSpec((tm, tn), lambda i, j, k: (i, j)),
        scratch_shapes=[pltpu.VMEM((tm, tn), jnp.float32)],
        compiler_params=pltpu.CompilerParams(
            dimension_semantics=("parallel", "parallel", "arbitrary"),
            vmem_limit_bytes=VMEM_LIMIT,
        ),
        cost_estimate=pl.CostEstimate(
            flops=2 * M * N * K,
            transcendentals=0,
            bytes_accessed=x_bytes * M * K + w_bytes * K * N + 4 * N + o_bytes * M * N,
        ),
    )(x, w, b.reshape(1, N))


def pallas_mha_attention(q, k, v, num_heads, d_model, *, tq_target=256, tk_target=256):
    """q, k, v: [B, S, D] bf16 (head-major column layout) -> attention output [B, S, D].

    Flash-style: grid (B, q_tiles, kv_tiles); online softmax across the kv axis; heads
    split inside the kernel and merged straight into the lane-dense output layout.
    """
    B, S, D = q.shape
    hd = d_model // num_heads
    tq = _pick_tile(S, tq_target, 128)   # 128-aligned tiles (fall back to full S)
    tk = _pick_tile(S, tk_target, 128)
    grid = (B, S // tq, S // tk)
    # Note (v7x): B * (S // tq) should be >= 2 so both TensorCores get work.

    kernel = functools.partial(_mha_flash_kernel, num_heads=num_heads, head_dim=hd)

    itemsize = jnp.dtype(q.dtype).itemsize
    q_tiles = S // tq

    return pl.pallas_call(
        kernel,
        out_shape=jax.ShapeDtypeStruct((B, S, D), q.dtype),
        grid=grid,
        in_specs=[
            pl.BlockSpec((1, tq, D), lambda b, qi, ki: (b, qi, 0)),   # Q
            pl.BlockSpec((1, tk, D), lambda b, qi, ki: (b, ki, 0)),   # K
            pl.BlockSpec((1, tk, D), lambda b, qi, ki: (b, ki, 0)),   # V
        ],
        out_specs=pl.BlockSpec((1, tq, D), lambda b, qi, ki: (b, qi, 0)),
        scratch_shapes=[
            pltpu.VMEM((num_heads, tq, 1), jnp.float32),   # m (running max)
            pltpu.VMEM((num_heads, tq, 1), jnp.float32),   # l (running denom)
            pltpu.VMEM((num_heads, tq, hd), jnp.float32),  # acc (unnormalized out)
        ],
        compiler_params=pltpu.CompilerParams(
            dimension_semantics=("parallel", "parallel", "arbitrary"),
            vmem_limit_bytes=VMEM_LIMIT,
        ),
        cost_estimate=pl.CostEstimate(
            flops=4 * B * num_heads * S * S * hd,
            transcendentals=B * num_heads * S * S,
            # K/V are re-streamed once per q tile; output written once.
            bytes_accessed=itemsize * B * S * D * (2 + 2 * q_tiles),
        ),
    )(q, k, v)


# ---------------------------------------------------------------------------
# Parameter prep (one-time) + forward
# ---------------------------------------------------------------------------

def prepare_params(params, num_heads):
    """Head-major QKV column reorder, 1/sqrt(hd) folded into Q, bf16 weight cast."""
    d_model = params["w_out"].shape[0]
    hd = d_model // num_heads

    # Torch layout: output column for (head h, part p, offset r) lives at h*3*hd + p*hd + r.
    # Reorder to [Q_all | K_all | V_all], each part head-major with hd-wide blocks.
    perm = (jnp.arange(3)[:, None, None] * hd
            + jnp.arange(num_heads)[None, :, None] * (3 * hd)
            + jnp.arange(hd)[None, None, :]).reshape(-1)
    w = params["w_qkv"][:, perm]
    b = params["b_qkv"][perm]

    scale = 1.0 / math.sqrt(hd)   # folded into the Q projection (weights + bias)
    return {
        "w_q": (w[:, :d_model] * scale).astype(jnp.bfloat16),
        "b_q": (b[:d_model] * scale).astype(jnp.float32),
        "w_k": w[:, d_model:2 * d_model].astype(jnp.bfloat16),
        "b_k": b[d_model:2 * d_model].astype(jnp.float32),
        "w_v": w[:, 2 * d_model:].astype(jnp.bfloat16),
        "b_v": b[2 * d_model:].astype(jnp.float32),
        "w_out": params["w_out"].astype(jnp.bfloat16),
        "b_out": params["b_out"].astype(jnp.float32),
    }


def multi_head_attention(x, prepped, num_heads):
    """Forward pass matching the PyTorch MultiHeadAttention module (mask=None)."""
    B, S, D = x.shape
    xb = x.astype(jnp.bfloat16).reshape(B * S, D)

    # qkv projection as three D-wide matmuls (bf16 outputs feed attention directly).
    q = pallas_linear(xb, prepped["w_q"], prepped["b_q"], out_dtype=jnp.bfloat16)
    k = pallas_linear(xb, prepped["w_k"], prepped["b_k"], out_dtype=jnp.bfloat16)
    v = pallas_linear(xb, prepped["w_v"], prepped["b_v"], out_dtype=jnp.bfloat16)

    # scaled dot-product attention per head, output merged to [B, S, D] inside the kernel
    values = pallas_mha_attention(q.reshape(B, S, D), k.reshape(B, S, D),
                                  v.reshape(B, S, D), num_heads, D)

    # out = Linear(d_model, d_model)(values)
    out = pallas_linear(values.reshape(B * S, D), prepped["w_out"], prepped["b_out"],
                        out_dtype=jnp.float32)
    return out.reshape(B, S, D)


# ---------------------------------------------------------------------------
# Pure-JAX reference (for correctness check)
# ---------------------------------------------------------------------------

def reference_mha(x, params, num_heads):
    B, S, D = x.shape
    hd = D // num_heads
    qkv = x @ params["w_qkv"] + params["b_qkv"]
    qkv = qkv.reshape(B, S, num_heads, 3 * hd).transpose(0, 2, 1, 3)
    q, k, v = jnp.split(qkv, 3, axis=-1)
    scores = jnp.einsum("bhqd,bhkd->bhqk", q, k) / math.sqrt(hd)
    attn = jax.nn.softmax(scores, axis=-1)
    vals = jnp.einsum("bhqk,bhkd->bhqd", attn, v)
    vals = vals.transpose(0, 2, 1, 3).reshape(B, S, D)
    return vals @ params["w_out"] + params["b_out"]


# ---------------------------------------------------------------------------
# Main
# ---------------------------------------------------------------------------

if __name__ == "__main__":
    # Small shapes consistent with the module's forward:
    batch, seq, d_model, num_heads = 2, 8, 32, 4

    key = jax.random.PRNGKey(0)
    kx, kw1, kb1, kw2, kb2 = jax.random.split(key, 5)

    x = jax.random.normal(kx, (batch, seq, d_model), dtype=jnp.float32)

    # Deterministic parameter init (weights stored as [in, out], i.e. W^T of torch.nn.Linear)
    params = {
        "w_qkv": jax.random.normal(kw1, (d_model, 3 * d_model), jnp.float32) * 0.05,
        "b_qkv": jax.random.normal(kb1, (3 * d_model,), jnp.float32) * 0.05,
        "w_out": jax.random.normal(kw2, (d_model, d_model), jnp.float32) * 0.05,
        "b_out": jax.random.normal(kb2, (d_model,), jnp.float32) * 0.05,
    }

    prepped = prepare_params(params, num_heads)
    out = multi_head_attention(x, prepped, num_heads)
    out = jax.block_until_ready(out)

    ref = reference_mha(x, params, num_heads)
    assert out.shape == (batch, seq, d_model)
    # bf16 MXU operands (f32 accumulation) -> tolerance reflects bf16 rounding only;
    # the softmax normalization itself is now an exact f32 divide.
    err = float(jnp.max(jnp.abs(out - ref)))
    assert err < 3e-2, f"mismatch vs. pure-JAX reference (max abs err {err})"

    print("KERNEL_OK")
</pallas_src>

<mosaic_0001>
module attributes {stable_mosaic.version = 11 : i64} {
  func.func @_linear_kernel(%arg0: i32, %arg1: i32, %arg2: i32, %arg3: memref<16x32xbf16, #tpu.memory_space<vmem>>, %arg4: memref<32x32xbf16, #tpu.memory_space<vmem>>, %arg5: memref<1x32xf32, #tpu.memory_space<vmem>>, %arg6: memref<16x32xbf16, #tpu.memory_space<vmem>>, %arg7: memref<16x32xf32, #tpu.memory_space<vmem>>) attributes {dimension_semantics = [#tpu.dimension_semantics<parallel>, #tpu.dimension_semantics<parallel>, #tpu.dimension_semantics<arbitrary>], iteration_bounds = array<i64: 1, 1, 1>, scalar_prefetch = 0 : i64, scratch_operands = 1 : i64, tpu.core_type = #tpu.core_type<tc>, window_params = [{transform_indices = @transform_0, window_bounds = array<i64: 16, 32>}, {transform_indices = @transform_1, window_bounds = array<i64: 32, 32>}, {transform_indices = @transform_2, window_bounds = array<i64: 1, 32>}, {transform_indices = @transform_3, window_bounds = array<i64: 16, 32>}]} {
    %c0_i32 = arith.constant 0 : i32
    %0 = arith.cmpi eq, %arg2, %c0_i32 : i32
    %1 = arith.extui %0 : i1 to i32
    %c0_i32_0 = arith.constant 0 : i32
    %2 = arith.cmpi ne, %1, %c0_i32_0 : i32
    scf.if %2 {
      %cst_10 = arith.constant 0.000000e+00 : f32
      %12 = vector.broadcast %cst_10 : f32 to vector<16x32xf32>
      %c0_11 = arith.constant 0 : index
      %c0_12 = arith.constant 0 : index
      %13 = vector.load %arg7[%c0_11, %c0_12] : memref<16x32xf32, #tpu.memory_space<vmem>>, vector<16x32xf32>
      tpu.vector_store %arg7[%c0_11, %c0_12], %12 {strides = array<i32>} : memref<16x32xf32, #tpu.memory_space<vmem>>, vector<16x32xf32>,
    } else {
    }
    %c0 = arith.constant 0 : index
    %c0_1 = arith.constant 0 : index
    %3 = vector.load %arg7[%c0, %c0_1] : memref<16x32xf32, #tpu.memory_space<vmem>>, vector<16x32xf32>
    %c0_2 = arith.constant 0 : index
    %c0_3 = arith.constant 0 : index
    %4 = vector.load %arg3[%c0_2, %c0_3] : memref<16x32xbf16, #tpu.memory_space<vmem>>, vector<16x32xbf16>
    %c0_4 = arith.constant 0 : index
    %c0_5 = arith.constant 0 : index
    %5 = vector.load %arg4[%c0_4, %c0_5] : memref<32x32xbf16, #tpu.memory_space<vmem>>, vector<32x32xbf16>
    %cst = arith.constant dense<0.000000e+00> : vector<16x32xf32>
    %6 = tpu.matmul %4, %5, %cst {dimension_numbers = #tpu.dot_dimension_numbers<[1], [0], [0], [1], [0, 0, 1, 1], [], []>} : vector<16x32xbf16>, vector<32x32xbf16>, vector<16x32xf32> -> vector<16x32xf32>
    %7 = arith.addf %3, %6 : vector<16x32xf32>
    %c0_6 = arith.constant 0 : index
    %c0_7 = arith.constant 0 : index
    %8 = vector.load %arg7[%c0_6, %c0_7] : memref<16x32xf32, #tpu.memory_space<vmem>>, vector<16x32xf32>
    tpu.vector_store %arg7[%c0_6, %c0_7], %7 {strides = array<i32>} : memref<16x32xf32, #tpu.memory_space<vmem>>, vector<16x32xf32>,
    %c0_i32_8 = arith.constant 0 : i32
    %9 = arith.cmpi eq, %arg2, %c0_i32_8 : i32
    %10 = arith.extui %9 : i1 to i32
    %c0_i32_9 = arith.constant 0 : i32
    %11 = arith.cmpi ne, %10, %c0_i32_9 : i32
    scf.if %11 {
      %c0_10 = arith.constant 0 : index
      %c0_11 = arith.constant 0 : index
      %12 = vector.load %arg7[%c0_10, %c0_11] : memref<16x32xf32, #tpu.memory_space<vmem>>, vector<16x32xf32>
      %c0_12 = arith.constant 0 : index
      %c0_13 = arith.constant 0 : index
      %13 = vector.load %arg5[%c0_12, %c0_13] : memref<1x32xf32, #tpu.memory_space<vmem>>, vector<1x32xf32>
      %14 = vector.broadcast %13 : vector<1x32xf32> to vector<16x32xf32>
      %15 = arith.addf %12, %14 : vector<16x32xf32>
      %16 = arith.truncf %15 : vector<16x32xf32> to vector<16x32xbf16>
      %c0_14 = arith.constant 0 : index
      %c0_15 = arith.constant 0 : index
      %17 = vector.load %arg6[%c0_14, %c0_15] : memref<16x32xbf16, #tpu.memory_space<vmem>>, vector<16x32xbf16>
      tpu.vector_store %arg6[%c0_14, %c0_15], %16 {strides = array<i32>} : memref<16x32xbf16, #tpu.memory_space<vmem>>, vector<16x32xbf16>,
    } else {
    }
    return
  }
  func.func @transform_0(%arg0: i32, %arg1: i32, %arg2: i32) -> (i32, i32) {
    %c0_i32 = arith.constant 0 : i32
    return %arg0, %arg2 : i32, i32
  }
  func.func @transform_1(%arg0: i32, %arg1: i32, %arg2: i32) -> (i32, i32) {
    %c0_i32 = arith.constant 0 : i32
    return %arg2, %arg1 : i32, i32
  }
  func.func @transform_2(%arg0: i32, %arg1: i32, %arg2: i32) -> (i32, i32) {
    %c0_i32 = arith.constant 0 : i32
    %c0_i32_0 = arith.constant 0 : i32
    return %c0_i32, %arg1 : i32, i32
  }
  func.func @transform_3(%arg0: i32, %arg1: i32, %arg2: i32) -> (i32, i32) {
    %c0_i32 = arith.constant 0 : i32
    return %arg0, %arg1 : i32, i32
  }
}

</mosaic_0001>

<llo_original>
// kernel: tpu_custom_call.1
$region0: #{tpu_custom_call.1}
  #allocation0 [shape = 'u32[]', space=smem, size = 0x4, offset = 0x4, fixed_abs, tag = 'smem constant byte address 0x4 - core index']
  #allocation1 [shape = 'u32[144,128]{1,0:T(1,128)}', space=vmem, size = 0x12000, scoped, tag = 'internal scratch']
  #allocation2 [shape = 'f32[16,32]{1,0:T(8,128)}', space=vmem, size = 0x2000, scoped, tag = 'scratch operand']
  %s0 = inlined_call_operand.hbm [shape: bf16[16,32], index: 0, kind: input, shape index: {}]
  %s1 = inlined_call_operand.hbm [shape: bf16[32,32], index: 1, kind: input, shape index: {}]
  %s2 = inlined_call_operand.vmem [shape: f32[1,32], index: 2, kind: input, shape index: {}]
  %s3 = inlined_call_operand.hbm [shape: bf16[16,32], index: 3, kind: output, shape index: {}]
  %s4 = sld [smem:[#allocation0]]
  $region38: #{tpu_custom_call.1} parent=0
    _
  %s6 = ssub.s32 1, %s4
  %s7 = scalar_select 0, %s6, %s4
  $region1: #{tpu_custom_call.1} parent=0
    #allocation3 [shape = 'u8[4096]{0}', space=vmem, size = 0x1000, scoped, tag = 'input window, operand 0, single buffered']
    #allocation4 [shape = 's32[1]{0}', space=sflag, size = 0x4, scoped, tag = 'scoped memory for tpu_custom_call.1']
    #allocation5 [shape = 's32[1]{0}', space=sflag, size = 0x4, scoped, tag = 'scoped memory for tpu_custom_call.1']
    #allocation6 [shape = 'u8[8192]{0}', space=vmem, size = 0x2000, scoped, tag = 'input window, operand 1, single buffered']
    #allocation7 [shape = 's32[1]{0}', space=sflag, size = 0x4, scoped, tag = 'scoped memory for tpu_custom_call.1']
    #allocation8 [shape = 'u8[4096]{0}', space=vmem, size = 0x1000, scoped, tag = 'output window, operand 0, single buffered']
    %8 = vsyncpa [#allocation4], 0
    %9 = vsyncpa [#allocation7], 0
    %10 = vsyncpa [#allocation5], 0
    // Predicated region
    $region2: #{tpu_custom_call.1} parent=1 // pred_check
      _
    $region3: #{tpu_custom_call.1} parent=1 // pred_check_branch
      %12 = sbr.rel (0) target = $region5
    $region4: #{tpu_custom_call.1} parent=1 // pred_region
      %s14 = ssub.s32 128, 128
      %15 = vsyncadd [#allocation4], %s14
      %s16 = sshll.u32 [#allocation3], 4
      %s17 = int_to_ptr.vmem [resolvable:$true] %s16
      %22 = dma.hbm_to_vmem [thread:$0]  %s0, 128, %s17, [#allocation4], 64, 64, 4
    $region5: #{tpu_custom_call.1} parent=1 // pred_fallthru
      _
    // Predicated region
    $region6: #{tpu_custom_call.1} parent=1 // pred_check
      _
    $region7: #{tpu_custom_call.1} parent=1 // pred_check_branch
      %24 = sbr.rel (0) target = $region9
    $region8: #{tpu_custom_call.1} parent=1 // pred_region
      %s26 = ssub.s32 256, 256
      %27 = vsyncadd [#allocation7], %s26
      %s28 = sshll.u32 [#allocation6], 4
      %s29 = int_to_ptr.vmem [resolvable:$true] %s28
      %34 = dma.hbm_to_vmem [thread:$0]  %s1, 256, %s29, [#allocation7], 64, 64, 4
    $region9: #{tpu_custom_call.1} parent=1 // pred_fallthru
      _
    // Predicated region
    $region10: #{tpu_custom_call.1} parent=1 // pred_check
      _
    $region11: #{tpu_custom_call.1} parent=1 // pred_check_branch
      %36 = sbr.rel (0) target = $region13
    $region12: #{tpu_custom_call.1} parent=1 // pred_region
      _
    $region13: #{tpu_custom_call.1} parent=1 // pred_fallthru
      _
    // Predicated region
    $region14: #{tpu_custom_call.1} parent=1 // pred_check
      _
    $region15: #{tpu_custom_call.1} parent=1 // pred_check_branch
      %38 = sbr.rel (0) target = $region17
    $region16: #{tpu_custom_call.1} parent=1 // pred_region
      %39 = dma.done [#allocation4], 128
    $region17: #{tpu_custom_call.1} parent=1 // pred_fallthru
      _
    // Predicated region
    $region18: #{tpu_custom_call.1} parent=1 // pred_check
      _
    $region19: #{tpu_custom_call.1} parent=1 // pred_check_branch
      %41 = sbr.rel (0) target = $region21
    $region20: #{tpu_custom_call.1} parent=1 // pred_region
      %42 = dma.done [#allocation7], 256
    $region21: #{tpu_custom_call.1} parent=1 // pred_fallthru
      _
    %p44 = scmp.eq.s32.totalorder 0, 0
    // Predicated region
    $region22: #{tpu_custom_call.1} parent=1 // pred_check
      %p45 = pneg %p44
    $region23: #{tpu_custom_call.1} parent=1 // pred_check_branch
      %47 = sbr.rel (%p45) target = $region25
    $region24: #{tpu_custom_call.1} parent=1 // pred_region
      %vm48 = vcmask 261120
      %49 = vst.msk [vmem:[#allocation2] sm:$0xff] %vm48, 0.0
      %50 = vst.msk [vmem:[#allocation2 + $0x8] sm:$0xff] %vm48, 0.0
    $region25: #{tpu_custom_call.1} parent=1 // pred_fallthru
      _
    %v51 = vld [vmem:[#allocation2] sm:$0xff]
    %v52 = vld [vmem:[#allocation2 + $0x8] sm:$0xff]
    %v53 = vld [vmem:[#allocation3] sm:$0xf]
    %v54 = vld [vmem:[#allocation3 + $0x4] sm:$0xf]
    %v55 = vld [vmem:[#allocation6] sm:$0xf]
    %v56 = vld [vmem:[#allocation6 + $0x4] sm:$0xf]
    %v57 = vld [vmem:[#allocation6 + $0x8] sm:$0xf]
    %v58 = vld [vmem:[#allocation6 + $0xc] sm:$0xf]
    %v61 = vunpack.c.l.b16 %v53
    %v62 = vunpack.c.l.b16 %v54
    %v63 = vpack.c.b16 %v62, %v61
    %v68 = vunpack.c.l.b16 %v55
    %v69 = vunpack.c.l.b16 %v56
    %v70 = vunpack.c.l.b16 %v57
    %v71 = vunpack.c.l.b16 %v58
    %v72 = vpack.c.b16 %v69, %v68
    %v73 = vpack.c.b16 %v71, %v70
    %vm76 = vcmask 261120
    %v78 = vsel %vm76, %v63, 0
    %80 = vmatprep.subr.bf16.mxu0 0
    %81 = vmatpush1.bf16.msra.mxu0 %v72
    %82 = vmatprep.subr.bf16.mxu0 0
    %83 = vmatpush1.bf16.msra.mxu0 %v73
    %84 = vmatprep.subr.bf16.mxu0 0
    %85 = vmatpush1.bf16.msra.mxu0 0
    %86 = vmatprep.subr.bf16.mxu0 0
    %87 = vmatpush1.bf16.msra.mxu0 0
    %88 = vmatprep.subr.bf16.mxu0 0
    %89 = vmatpush1.bf16.msra.mxu0 0
    %90 = vmatprep.subr.bf16.mxu0 0
    %91 = vmatpush1.bf16.msra.mxu0 0
    %92 = vmatprep.subr.bf16.mxu0 0
    %93 = vmatpush1.bf16.msra.mxu0 0
    %94 = vmatprep.subr.bf16.mxu0 0
    %95 = vmatpush1.bf16.msra.mxu0 0
    %96 = vmatprep.subr.bf16.mxu0 0
    %97 = vmatpush1.bf16.msra.mxu0 0
    %98 = vmatprep.subr.bf16.mxu0 0
    %99 = vmatpush1.bf16.msra.mxu0 0
    %100 = vmatprep.subr.bf16.mxu0 0
    %101 = vmatpush1.bf16.msra.mxu0 0
    %102 = vmatprep.subr.bf16.mxu0 0
    %103 = vmatpush1.bf16.msra.mxu0 0
    %104 = vmatprep.subr.bf16.mxu0 0
    %105 = vmatpush1.bf16.msra.mxu0 0
    %106 = vmatprep.subr.bf16.mxu0 0
    %107 = vmatpush1.bf16.msra.mxu0 0
    %108 = vmatprep.subr.bf16.mxu0 0
    %109 = vmatpush1.bf16.msra.mxu0 0
    %110 = vmatprep.subr.bf16.mxu0 0
    %111 = vmatpush1.bf16.msra.mxu0 0
    %112 = vmatprep.mubr.bf16.mxu0 0
    %113 = vmatmul.mubr.bf16.gmra.mrb[0].mxu0 %v78
    %v114 = vpop.f32.mrb[0].mxu0
    %v115 = vadd.f32 0.0, %v114
    %v116 = vpop.f32.mrb[0].mxu0
    %v117 = vpop.f32.mrb[0].mxu0
    %v118 = vadd.f32 0.0, %v117
    %v119 = vpop.f32.mrb[0].mxu0
    %120 = vdwg.mxu0
    %v121 = vadd.f32 %v51, %v115
    %v122 = vadd.f32 %v52, %v118
    %123 = vst.msk [vmem:[#allocation2] sm:$0xff] %vm76, %v121
    %124 = vst.msk [vmem:[#allocation2 + $0x8] sm:$0xff] %vm76, %v122
    // Predicated region
    $region26: #{tpu_custom_call.1} parent=1 // pred_check
      %p125 = pneg %p44
    $region27: #{tpu_custom_call.1} parent=1 // pred_check_branch
      %127 = sbr.rel (%p125) target = $region29
    $region28: #{tpu_custom_call.1} parent=1 // pred_region
      %v128 = vld [vmem:[#allocation2] sm:$0xff]
      %v129 = vld [vmem:[#allocation2 + $0x8] sm:$0xff]
      %v130 = vld [vmem:[%s2] sm:$0x1]
      %v132 = vlaneseq
      %v133 = vshrl.u32 %v132, 7
      %v134 = vsub.s32 0, %v133
      %v135 = vrot.slane %v130, %v134
      %v137 = vadd.f32 %v128, %v135
      %v138 = vadd.f32 %v129, %v135
      %v139 = vpack.c.bf16 %v138, %v137
      %v141 = vunpack.c.l.b16 %v139
      %v142 = vunpack.c.h.b16 %v139
      %v143 = vpack.c.b16 %v141, %v141
      %v144 = vpack.c.b16 %v142, %v142
      %vm147 = vcmask 257024
      %148 = vst.msk [vmem:[#allocation8] sm:$0xf] %vm147, %v143
      %149 = vst.msk [vmem:[#allocation8 + $0x4] sm:$0xf] %vm147, %v144
    $region29: #{tpu_custom_call.1} parent=1 // pred_fallthru
      _
    // Predicated region
    $region30: #{tpu_custom_call.1} parent=1 // pred_check
      _
    $region31: #{tpu_custom_call.1} parent=1 // pred_check_branch
      %151 = sbr.rel (0) target = $region33
    $region32: #{tpu_custom_call.1} parent=1 // pred_region
      %s153 = ssub.s32 128, 128
      %154 = vsyncadd [#allocation5], %s153
      %s155 = sshll.u32 [#allocation8], 4
      %s156 = int_to_ptr.vmem [resolvable:$true] %s155
      %161 = dma.vmem_to_hbm [thread:$0]  %s156, 128, %s3, [#allocation5], 64, 64, 4
    $region33: #{tpu_custom_call.1} parent=1 // pred_fallthru
      _
    // Predicated region
    $region34: #{tpu_custom_call.1} parent=1 // pred_check
      _
    $region35: #{tpu_custom_call.1} parent=1 // pred_check_branch
      %163 = sbr.rel (0) target = $region37
    $region36: #{tpu_custom_call.1} parent=1 // pred_region
      %164 = dma.done [#allocation5], 128
    $region37: #{tpu_custom_call.1} parent=1 // pred_fallthru
      _
    %165 = vsyncpa [#allocation4], 1
    %166 = vsyncpa [#allocation7], 1
    %167 = vsyncpa [#allocation5], 1

</llo_original>
